<compile_context>
chip_gen: v7x
topology: tpu7x:2x2x1
jax: 0.10.0
libtpu: 0.0.40
codegen_flags: <defaults>
</compile_context>

<pallas_src>
import jax
import jax.numpy as jnp
from jax.experimental import pallas as pl
from jax.experimental.pallas import tpu as pltpu

HIDDEN = 128
LANE = 128
SUBLANE = 16              # batch-tile alignment (covers fp32 (8) and bf16 (16) packing)
DEFAULT_TILE_B = 1024     # overhead-bound at 256; ~85% of HBM roofline at 512-1024
VMEM_BUDGET = 40 << 20    # keep comfortably under v7x's 64 MiB physical VMEM


def _round_up(n, m):
    return ((n + m - 1) // m) * m


def _dqn_kernel(x_ref,
                w1_ref, b1_ref,
                w2_ref, b2_ref,
                w3_ref, b3_ref,
                wh_ref, bh_ref,
                out_ref):
    x = x_ref[...]
    cdt = x.dtype  # MXU operand dtype (bf16 or fp32); accumulation is always fp32.

    # Biases stay fp32: they add into the fp32 accumulator, ReLU runs in fp32,
    # then the result packs back to the operand dtype (cheap VPU filler).
    h = jnp.dot(x, w1_ref[...], preferred_element_type=jnp.float32) + b1_ref[...]
    h = jnp.maximum(h, 0.0).astype(cdt)

    h = jnp.dot(h, w2_ref[...], preferred_element_type=jnp.float32) + b2_ref[...]
    h = jnp.maximum(h, 0.0).astype(cdt)

    h = jnp.dot(h, w3_ref[...], preferred_element_type=jnp.float32) + b3_ref[...]
    h = jnp.maximum(h, 0.0).astype(cdt)

    # Fused dueling head: single lane-dense matmul (output padded to 128 lanes).
    out_ref[...] = (jnp.dot(h, wh_ref[...], preferred_element_type=jnp.float32)
                    + bh_ref[...]).astype(out_ref.dtype)


def _choose_tiling(B, tile_b):
    """Sublane-aligned batch tile; >= 2 grid steps when the batch allows it
    so the 'parallel' axis can shard across v7x's two TensorCores."""
    b_min = _round_up(B, SUBLANE)
    tile_b = _round_up(max(min(tile_b, b_min), SUBLANE), SUBLANE)
    if (-(-b_min // tile_b)) < 2 and b_min >= 2 * SUBLANE:
        tile_b = _round_up(-(-b_min // 2), SUBLANE)
    return tile_b


def advantage_dqn_forward(x, params, *, tile_b=DEFAULT_TILE_B, out_dtype=None,
                          trim_output=True):
    """x: [B, size_s]; params: output of fuse_head() (optionally cast_params()).

    Returns [B, size_a] if trim_output, else the padded [b_pad, 128] block
    (caller slices / fuses the slice into the consumer)."""
    B, size_s = x.shape
    size_a = params["size_a"]
    a_pad = params["wh"].shape[1]
    compute_dtype = params["w1"].dtype
    if out_dtype is None:
        out_dtype = compute_dtype

    # Cast x to the operand dtype (bf16 by default) before streaming.
    x = x.astype(compute_dtype)

    weight_args = (params["w1"], params["b1"],
                   params["w2"], params["b2"],
                   params["w3"], params["b3"],
                   params["wh"], params["bh"])
    w_bytes = sum(int(a.size) * jnp.dtype(a.dtype).itemsize for a in weight_args)
    x_isz = jnp.dtype(compute_dtype).itemsize
    o_isz = jnp.dtype(out_dtype).itemsize

    tile_b = _choose_tiling(B, tile_b)
    # Shrink tiles if (double-buffered) footprint would blow the VMEM budget.
    while tile_b > SUBLANE and \
            2 * (tile_b * size_s * x_isz + tile_b * a_pad * o_isz + w_bytes) > VMEM_BUDGET:
        tile_b = max(SUBLANE, _round_up(tile_b // 2, SUBLANE))

    b_pad = _round_up(B, tile_b)
    if b_pad != B:
        x = jnp.pad(x, ((0, b_pad - B), (0, 0)))
    grid = (b_pad // tile_b,)

    footprint = 2 * (tile_b * size_s * x_isz + tile_b * a_pad * o_isz + w_bytes)
    vmem_limit = int(min(max(2 * footprint + (2 << 20), 16 << 20), 60 << 20))

    cost = pl.CostEstimate(
        flops=2 * b_pad * (size_s * HIDDEN + 2 * HIDDEN * HIDDEN + HIDDEN * a_pad),
        transcendentals=0,
        bytes_accessed=b_pad * size_s * x_isz + b_pad * a_pad * o_isz + w_bytes)

    def resident(a):
        # Small weight/bias arrays: full block, constant index -> DMA'd once
        # and kept VMEM-resident across all grid iterations.
        return pl.BlockSpec(a.shape, lambda i: (0, 0))

    out = pl.pallas_call(
        _dqn_kernel,
        out_shape=jax.ShapeDtypeStruct((b_pad, a_pad), out_dtype),
        grid=grid,
        in_specs=[pl.BlockSpec((tile_b, size_s), lambda i: (i, 0))]
                 + [resident(a) for a in weight_args],
        out_specs=pl.BlockSpec((tile_b, a_pad), lambda i: (i, 0)),
        compiler_params=pltpu.CompilerParams(
            dimension_semantics=("parallel",),
            vmem_limit_bytes=vmem_limit),
        cost_estimate=cost,
    )(x, *weight_args)

    if not trim_output:
        return out
    if b_pad == B and a_pad == size_a:
        return out
    return out[:B, :size_a]


def init_raw_params(key, size_s, size_a):
    """Same layer structure as the PyTorch module; weights stored as [in, out]
    (transposed w.r.t. torch.nn.Linear)."""
    ks = jax.random.split(key, 10)

    def lin(kw, kb, fan_in, fan_out):
        bound = float(fan_in) ** -0.5
        w = jax.random.uniform(kw, (fan_in, fan_out), jnp.float32, -bound, bound)
        b = jax.random.uniform(kb, (1, fan_out), jnp.float32, -bound, bound)
        return w, b

    w1, b1 = lin(ks[0], ks[1], size_s, HIDDEN)
    w2, b2 = lin(ks[2], ks[3], HIDDEN, HIDDEN)
    w3, b3 = lin(ks[4], ks[5], HIDDEN, HIDDEN)
    wb, bb = lin(ks[6], ks[7], HIDDEN, 1)
    wa, ba = lin(ks[8], ks[9], HIDDEN, size_a)
    return dict(w1=w1, b1=b1, w2=w2, b2=b2, w3=w3, b3=b3,
                wb=wb, bb=bb, wa=wa, ba=ba)


def fuse_head(raw):
    """One-time param transform: fold baseline + advantage + mean-subtraction
    into a single head matmul, zero-padded to a lane-dense 128-wide output.

        out = a + v - mean(a) = h @ W_head + b_head
        W_head = wa - col_mean(wa) + wb ;  b_head = ba - mean(ba) + bb
    """
    wa, ba = raw["wa"], raw["ba"]
    wb, bb = raw["wb"], raw["bb"]
    size_a = wa.shape[1]
    a_pad = _round_up(size_a, LANE)

    w_head = wa - jnp.mean(wa, axis=1, keepdims=True) + wb        # [128, A]
    b_head = ba - jnp.mean(ba, axis=1, keepdims=True) + bb        # [1, A]
    w_head = jnp.pad(w_head, ((0, 0), (0, a_pad - size_a)))       # [128, A_pad]
    b_head = jnp.pad(b_head, ((0, 0), (0, a_pad - size_a)))       # [1, A_pad]

    return dict(w1=raw["w1"], b1=raw["b1"],
                w2=raw["w2"], b2=raw["b2"],
                w3=raw["w3"], b3=raw["b3"],
                wh=w_head, bh=b_head, size_a=size_a)


def cast_params(fused, dtype=jnp.bfloat16):
    """Cast MXU operands (weights) AFTER head fusion; biases stay fp32 since
    they add into the fp32 MXU accumulator. This is the default fast path."""
    out = dict(fused)
    for k in ("w1", "w2", "w3", "wh"):
        out[k] = fused[k].astype(dtype)
    return out


def _reference_forward(x, p):
    """Pure-JAX mirror of the PyTorch module (unfused params)."""
    h = jnp.maximum(x @ p["w1"] + p["b1"], 0.0)
    h = jnp.maximum(h @ p["w2"] + p["b2"], 0.0)
    h = jnp.maximum(h @ p["w3"] + p["b3"], 0.0)
    v = h @ p["wb"] + p["bb"]
    a = h @ p["wa"] + p["ba"]
    return a + v - jnp.mean(a, axis=-1, keepdims=True)


if __name__ == "__main__":
    key = jax.random.PRNGKey(0)
    k_x, k_p, k_big = jax.random.split(key, 3)

    batch, size_s, size_a = 2, 32, 8
    x = jax.random.normal(k_x, (batch, size_s), jnp.float32)
    raw = init_raw_params(k_p, size_s, size_a)
    fused = fuse_head(raw)
    fused_bf16 = cast_params(fused)   # default fast path: bf16 operands / output

    ref = _reference_forward(x, raw)

    # fp32 validation path (tight check).
    out_f32 = jax.block_until_ready(
        advantage_dqn_forward(x, fused, out_dtype=jnp.float32))
    assert out_f32.shape == (batch, size_a)
    assert jnp.allclose(out_f32, ref, atol=1e-4, rtol=1e-4), "fp32 mismatch vs reference"

    # bf16 default path (bf16 operands + bf16 output, fp32 accumulation).
    out_bf16 = jax.block_until_ready(advantage_dqn_forward(x, fused_bf16))
    assert out_bf16.shape == (batch, size_a)
    assert jnp.allclose(out_bf16.astype(jnp.float32), ref, atol=0.2, rtol=0.2), \
        "bf16 mismatch vs reference"

    # Larger batch: tile-aligned (no wrapper pad), >= 2 grid steps (v7x megacore),
    # padded lane-dense output consumed directly (no wrapper slice pass).
    B_big = 512
    xb = jax.random.normal(k_big, (B_big, size_s), jnp.float32)
    out_big = jax.block_until_ready(
        advantage_dqn_forward(xb, fused_bf16, tile_b=DEFAULT_TILE_B, trim_output=False))
    ref_big = _reference_forward(xb, raw)
    assert out_big.shape[0] == B_big and out_big.shape[1] == LANE
    assert jnp.allclose(out_big[:, :size_a].astype(jnp.float32), ref_big,
                        atol=0.2, rtol=0.2), "batched bf16 mismatch vs reference"

    print("KERNEL_OK")
</pallas_src>

<mosaic_0001>
module attributes {stable_mosaic.version = 11 : i64} {
  func.func @_dqn_kernel(%arg0: i32, %arg1: memref<16x32xf32, #tpu.memory_space<vmem>>, %arg2: memref<32x128xf32, #tpu.memory_space<vmem>>, %arg3: memref<1x128xf32, #tpu.memory_space<vmem>>, %arg4: memref<128x128xf32, #tpu.memory_space<vmem>>, %arg5: memref<1x128xf32, #tpu.memory_space<vmem>>, %arg6: memref<128x128xf32, #tpu.memory_space<vmem>>, %arg7: memref<1x128xf32, #tpu.memory_space<vmem>>, %arg8: memref<128x128xf32, #tpu.memory_space<vmem>>, %arg9: memref<1x128xf32, #tpu.memory_space<vmem>>, %arg10: memref<16x128xf32, #tpu.memory_space<vmem>>) attributes {dimension_semantics = [#tpu.dimension_semantics<parallel>], iteration_bounds = array<i64: 1>, scalar_prefetch = 0 : i64, scratch_operands = 0 : i64, tpu.core_type = #tpu.core_type<tc>, window_params = [{transform_indices = @transform_0, window_bounds = array<i64: 16, 32>}, {pipeline_mode = #tpu.pipeline_mode<synchronous>, transform_indices = @transform_1, window_bounds = array<i64: 32, 128>}, {pipeline_mode = #tpu.pipeline_mode<synchronous>, transform_indices = @transform_2, window_bounds = array<i64: 1, 128>}, {pipeline_mode = #tpu.pipeline_mode<synchronous>, transform_indices = @transform_3, window_bounds = array<i64: 128, 128>}, {pipeline_mode = #tpu.pipeline_mode<synchronous>, transform_indices = @transform_4, window_bounds = array<i64: 1, 128>}, {pipeline_mode = #tpu.pipeline_mode<synchronous>, transform_indices = @transform_5, window_bounds = array<i64: 128, 128>}, {pipeline_mode = #tpu.pipeline_mode<synchronous>, transform_indices = @transform_6, window_bounds = array<i64: 1, 128>}, {pipeline_mode = #tpu.pipeline_mode<synchronous>, transform_indices = @transform_7, window_bounds = array<i64: 128, 128>}, {pipeline_mode = #tpu.pipeline_mode<synchronous>, transform_indices = @transform_8, window_bounds = array<i64: 1, 128>}, {transform_indices = @transform_9, window_bounds = array<i64: 16, 128>}]} {
    %c0 = arith.constant 0 : index
    %c0_0 = arith.constant 0 : index
    %0 = vector.load %arg1[%c0, %c0_0] : memref<16x32xf32, #tpu.memory_space<vmem>>, vector<16x32xf32>
    %c0_1 = arith.constant 0 : index
    %c0_2 = arith.constant 0 : index
    %1 = vector.load %arg2[%c0_1, %c0_2] : memref<32x128xf32, #tpu.memory_space<vmem>>, vector<32x128xf32>
    %cst = arith.constant dense<0.000000e+00> : vector<16x128xf32>
    %2 = tpu.matmul %0, %1, %cst {dimension_numbers = #tpu.dot_dimension_numbers<[1], [0], [0], [1], [0, 0, 1, 1], [], []>} : vector<16x32xf32>, vector<32x128xf32>, vector<16x128xf32> -> vector<16x128xf32>
    %c0_3 = arith.constant 0 : index
    %c0_4 = arith.constant 0 : index
    %3 = vector.load %arg3[%c0_3, %c0_4] : memref<1x128xf32, #tpu.memory_space<vmem>>, vector<1x128xf32>
    %4 = vector.broadcast %3 : vector<1x128xf32> to vector<16x128xf32>
    %5 = arith.addf %2, %4 : vector<16x128xf32>
    %cst_5 = arith.constant 0.000000e+00 : f32
    %6 = vector.broadcast %cst_5 : f32 to vector<16x128xf32>
    %7 = arith.maximumf %5, %6 : vector<16x128xf32>
    %c0_6 = arith.constant 0 : index
    %c0_7 = arith.constant 0 : index
    %8 = vector.load %arg4[%c0_6, %c0_7] : memref<128x128xf32, #tpu.memory_space<vmem>>, vector<128x128xf32>
    %cst_8 = arith.constant dense<0.000000e+00> : vector<16x128xf32>
    %9 = tpu.matmul %7, %8, %cst_8 {dimension_numbers = #tpu.dot_dimension_numbers<[1], [0], [0], [1], [0, 0, 1, 1], [], []>} : vector<16x128xf32>, vector<128x128xf32>, vector<16x128xf32> -> vector<16x128xf32>
    %c0_9 = arith.constant 0 : index
    %c0_10 = arith.constant 0 : index
    %10 = vector.load %arg5[%c0_9, %c0_10] : memref<1x128xf32, #tpu.memory_space<vmem>>, vector<1x128xf32>
    %11 = vector.broadcast %10 : vector<1x128xf32> to vector<16x128xf32>
    %12 = arith.addf %9, %11 : vector<16x128xf32>
    %cst_11 = arith.constant 0.000000e+00 : f32
    %13 = vector.broadcast %cst_11 : f32 to vector<16x128xf32>
    %14 = arith.maximumf %12, %13 : vector<16x128xf32>
    %c0_12 = arith.constant 0 : index
    %c0_13 = arith.constant 0 : index
    %15 = vector.load %arg6[%c0_12, %c0_13] : memref<128x128xf32, #tpu.memory_space<vmem>>, vector<128x128xf32>
    %cst_14 = arith.constant dense<0.000000e+00> : vector<16x128xf32>
    %16 = tpu.matmul %14, %15, %cst_14 {dimension_numbers = #tpu.dot_dimension_numbers<[1], [0], [0], [1], [0, 0, 1, 1], [], []>} : vector<16x128xf32>, vector<128x128xf32>, vector<16x128xf32> -> vector<16x128xf32>
    %c0_15 = arith.constant 0 : index
    %c0_16 = arith.constant 0 : index
    %17 = vector.load %arg7[%c0_15, %c0_16] : memref<1x128xf32, #tpu.memory_space<vmem>>, vector<1x128xf32>
    %18 = vector.broadcast %17 : vector<1x128xf32> to vector<16x128xf32>
    %19 = arith.addf %16, %18 : vector<16x128xf32>
    %cst_17 = arith.constant 0.000000e+00 : f32
    %20 = vector.broadcast %cst_17 : f32 to vector<16x128xf32>
    %21 = arith.maximumf %19, %20 : vector<16x128xf32>
    %c0_18 = arith.constant 0 : index
    %c0_19 = arith.constant 0 : index
    %22 = vector.load %arg8[%c0_18, %c0_19] : memref<128x128xf32, #tpu.memory_space<vmem>>, vector<128x128xf32>
    %cst_20 = arith.constant dense<0.000000e+00> : vector<16x128xf32>
    %23 = tpu.matmul %21, %22, %cst_20 {dimension_numbers = #tpu.dot_dimension_numbers<[1], [0], [0], [1], [0, 0, 1, 1], [], []>} : vector<16x128xf32>, vector<128x128xf32>, vector<16x128xf32> -> vector<16x128xf32>
    %c0_21 = arith.constant 0 : index
    %c0_22 = arith.constant 0 : index
    %24 = vector.load %arg9[%c0_21, %c0_22] : memref<1x128xf32, #tpu.memory_space<vmem>>, vector<1x128xf32>
    %25 = vector.broadcast %24 : vector<1x128xf32> to vector<16x128xf32>
    %26 = arith.addf %23, %25 : vector<16x128xf32>
    %c0_23 = arith.constant 0 : index
    %c0_24 = arith.constant 0 : index
    %27 = vector.load %arg10[%c0_23, %c0_24] : memref<16x128xf32, #tpu.memory_space<vmem>>, vector<16x128xf32>
    tpu.vector_store %arg10[%c0_23, %c0_24], %26 {strides = array<i32>} : memref<16x128xf32, #tpu.memory_space<vmem>>, vector<16x128xf32>,
    return
  }
  func.func @transform_0(%arg0: i32) -> (i32, i32) {
    %c0_i32 = arith.constant 0 : i32
    %c0_i32_0 = arith.constant 0 : i32
    return %arg0, %c0_i32 : i32, i32
  }
  func.func @transform_1(%arg0: i32) -> (i32, i32) {
    %c0_i32 = arith.constant 0 : i32
    %c0_i32_0 = arith.constant 0 : i32
    %c0_i32_1 = arith.constant 0 : i32
    return %c0_i32, %c0_i32_0 : i32, i32
  }
  func.func @transform_2(%arg0: i32) -> (i32, i32) {
    %c0_i32 = arith.constant 0 : i32
    %c0_i32_0 = arith.constant 0 : i32
    %c0_i32_1 = arith.constant 0 : i32
    return %c0_i32, %c0_i32_0 : i32, i32
  }
  func.func @transform_3(%arg0: i32) -> (i32, i32) {
    %c0_i32 = arith.constant 0 : i32
    %c0_i32_0 = arith.constant 0 : i32
    %c0_i32_1 = arith.constant 0 : i32
    return %c0_i32, %c0_i32_0 : i32, i32
  }
  func.func @transform_4(%arg0: i32) -> (i32, i32) {
    %c0_i32 = arith.constant 0 : i32
    %c0_i32_0 = arith.constant 0 : i32
    %c0_i32_1 = arith.constant 0 : i32
    return %c0_i32, %c0_i32_0 : i32, i32
  }
  func.func @transform_5(%arg0: i32) -> (i32, i32) {
    %c0_i32 = arith.constant 0 : i32
    %c0_i32_0 = arith.constant 0 : i32
    %c0_i32_1 = arith.constant 0 : i32
    return %c0_i32, %c0_i32_0 : i32, i32
  }
  func.func @transform_6(%arg0: i32) -> (i32, i32) {
    %c0_i32 = arith.constant 0 : i32
    %c0_i32_0 = arith.constant 0 : i32
    %c0_i32_1 = arith.constant 0 : i32
    return %c0_i32, %c0_i32_0 : i32, i32
  }
  func.func @transform_7(%arg0: i32) -> (i32, i32) {
    %c0_i32 = arith.constant 0 : i32
    %c0_i32_0 = arith.constant 0 : i32
    %c0_i32_1 = arith.constant 0 : i32
    return %c0_i32, %c0_i32_0 : i32, i32
  }
  func.func @transform_8(%arg0: i32) -> (i32, i32) {
    %c0_i32 = arith.constant 0 : i32
    %c0_i32_0 = arith.constant 0 : i32
    %c0_i32_1 = arith.constant 0 : i32
    return %c0_i32, %c0_i32_0 : i32, i32
  }
  func.func @transform_9(%arg0: i32) -> (i32, i32) {
    %c0_i32 = arith.constant 0 : i32
    %c0_i32_0 = arith.constant 0 : i32
    return %arg0, %c0_i32 : i32, i32
  }
}

</mosaic_0001>

<llo_original>
// kernel: tpu_custom_call.1
$region0: #{tpu_custom_call.1}
  #allocation0 [shape = 'u32[]', space=smem, size = 0x4, offset = 0x4, fixed_abs, tag = 'smem constant byte address 0x4 - core index']
  #allocation1 [shape = 'u32[144,128]{1,0:T(1,128)}', space=vmem, size = 0x12000, scoped, tag = 'internal scratch']
  %s0 = inlined_call_operand.hbm [shape: f32[16,32], index: 0, kind: input, shape index: {}]
  %s1 = inlined_call_operand.hbm [shape: f32[32,128], index: 1, kind: input, shape index: {}]
  %s2 = inlined_call_operand.vmem [shape: f32[1,128], index: 2, kind: input, shape index: {}]
  %s3 = inlined_call_operand.hbm [shape: f32[128,128], index: 3, kind: input, shape index: {}]
  %s4 = inlined_call_operand.vmem [shape: f32[1,128], index: 4, kind: input, shape index: {}]
  %s5 = inlined_call_operand.hbm [shape: f32[128,128], index: 5, kind: input, shape index: {}]
  %s6 = inlined_call_operand.vmem [shape: f32[1,128], index: 6, kind: input, shape index: {}]
  %s7 = inlined_call_operand.hbm [shape: f32[128,128], index: 7, kind: input, shape index: {}]
  %s8 = inlined_call_operand.vmem [shape: f32[1,128], index: 8, kind: input, shape index: {}]
  %s9 = inlined_call_operand.hbm [shape: f32[16,128], index: 9, kind: output, shape index: {}]
  %s10 = sld [smem:[#allocation0]]
  $region66: #{tpu_custom_call.1} parent=0
    _
  %s12 = ssub.s32 1, %s10
  %s13 = scalar_select 0, %s12, %s10
  $region1: #{tpu_custom_call.1} parent=0
    #allocation2 [shape = 'u8[8192]{0}', space=vmem, size = 0x2000, scoped, tag = 'input window, operand 0, single buffered']
    #allocation3 [shape = 's32[1]{0}', space=sflag, size = 0x4, scoped, tag = 'scoped memory for tpu_custom_call.1']
    #allocation4 [shape = 's32[1]{0}', space=sflag, size = 0x4, scoped, tag = 'scoped memory for tpu_custom_call.1']
    #allocation5 [shape = 'u8[16384]{0}', space=vmem, size = 0x4000, scoped, tag = 'input window, operand 1, single buffered']
    #allocation6 [shape = 's32[1]{0}', space=sflag, size = 0x4, scoped, tag = 'scoped memory for tpu_custom_call.1']
    #allocation7 [shape = 'u8[65536]{0}', space=vmem, size = 0x10000, scoped, tag = 'input window, operand 3, single buffered']
    #allocation8 [shape = 'u8[65536]{0}', space=vmem, size = 0x10000, scoped, tag = 'input window, operand 5, single buffered']
    #allocation9 [shape = 's32[1]{0}', space=sflag, size = 0x4, scoped, tag = 'scoped memory for tpu_custom_call.1']
    #allocation10 [shape = 'u8[65536]{0}', space=vmem, size = 0x10000, scoped, tag = 'input window, operand 7, single buffered']
    #allocation11 [shape = 'u8[8192]{0}', space=vmem, size = 0x2000, scoped, tag = 'output window, operand 0, single buffered']
    %14 = vsyncpa [#allocation3], 0
    %15 = vsyncpa [#allocation6], 0
    %16 = vsyncpa [#allocation9], 0
    %17 = vsyncpa [#allocation4], 0
    // Predicated region
    $region2: #{tpu_custom_call.1} parent=1 // pred_check
      _
    $region3: #{tpu_custom_call.1} parent=1 // pred_check_branch
      %19 = sbr.rel (0) target = $region5
    $region4: #{tpu_custom_call.1} parent=1 // pred_region
      %s21 = ssub.s32 256, 256
      %22 = vsyncadd [#allocation3], %s21
      %s23 = sshll.u32 [#allocation2], 4
      %s24 = int_to_ptr.vmem [resolvable:$true] %s23
      %29 = dma.hbm_to_vmem [thread:$0]  %s0, 256, %s24, [#allocation3], 128, 128, 8
    $region5: #{tpu_custom_call.1} parent=1 // pred_fallthru
      _
    // Predicated region
    $region6: #{tpu_custom_call.1} parent=1 // pred_check
      _
    $region7: #{tpu_custom_call.1} parent=1 // pred_check_branch
      %31 = sbr.rel (0) target = $region9
    $region8: #{tpu_custom_call.1} parent=1 // pred_region
      %s33 = ssub.s32 512, 512
      %34 = vsyncadd [#allocation6], %s33
      %s35 = sshll.u32 [#allocation5], 4
      %s36 = int_to_ptr.vmem [resolvable:$true] %s35
      %41 = dma.hbm_to_vmem [thread:$0]  %s1, 512, %s36, [#allocation6], 128, 128, 8
    $region9: #{tpu_custom_call.1} parent=1 // pred_fallthru
      _
    // Predicated region
    $region10: #{tpu_custom_call.1} parent=1 // pred_check
      _
    $region11: #{tpu_custom_call.1} parent=1 // pred_check_branch
      %43 = sbr.rel (0) target = $region13
    $region12: #{tpu_custom_call.1} parent=1 // pred_region
      _
    $region13: #{tpu_custom_call.1} parent=1 // pred_fallthru
      _
    // Predicated region
    $region14: #{tpu_custom_call.1} parent=1 // pred_check
      _
    $region15: #{tpu_custom_call.1} parent=1 // pred_check_branch
      %45 = sbr.rel (0) target = $region17
    $region16: #{tpu_custom_call.1} parent=1 // pred_region
      %s47 = ssub.s32 2048, 2048
      %48 = vsyncadd [#allocation6], %s47
      %s49 = sshll.u32 [#allocation7], 4
      %s50 = int_to_ptr.vmem [resolvable:$true] %s49
      %55 = dma.hbm_to_vmem [thread:$0]  %s3, 2048, %s50, [#allocation6], 128, 128, 8
    $region17: #{tpu_custom_call.1} parent=1 // pred_fallthru
      _
    // Predicated region
    $region18: #{tpu_custom_call.1} parent=1 // pred_check
      _
    $region19: #{tpu_custom_call.1} parent=1 // pred_check_branch
      %57 = sbr.rel (0) target = $region21
    $region20: #{tpu_custom_call.1} parent=1 // pred_region
      _
    $region21: #{tpu_custom_call.1} parent=1 // pred_fallthru
      _
    // Predicated region
    $region22: #{tpu_custom_call.1} parent=1 // pred_check
      _
    $region23: #{tpu_custom_call.1} parent=1 // pred_check_branch
      %59 = sbr.rel (0) target = $region25
    $region24: #{tpu_custom_call.1} parent=1 // pred_region
      %s61 = ssub.s32 2048, 2048
      %62 = vsyncadd [#allocation9], %s61
      %s63 = sshll.u32 [#allocation8], 4
      %s64 = int_to_ptr.vmem [resolvable:$true] %s63
      %69 = dma.hbm_to_vmem [thread:$0]  %s5, 2048, %s64, [#allocation9], 128, 128, 8
    $region25: #{tpu_custom_call.1} parent=1 // pred_fallthru
      _
    // Predicated region
    $region26: #{tpu_custom_call.1} parent=1 // pred_check
      _
    $region27: #{tpu_custom_call.1} parent=1 // pred_check_branch
      %71 = sbr.rel (0) target = $region29
    $region28: #{tpu_custom_call.1} parent=1 // pred_region
      _
    $region29: #{tpu_custom_call.1} parent=1 // pred_fallthru
      _
    // Predicated region
    $region30: #{tpu_custom_call.1} parent=1 // pred_check
      _
    $region31: #{tpu_custom_call.1} parent=1 // pred_check_branch
      %73 = sbr.rel (0) target = $region33
    $region32: #{tpu_custom_call.1} parent=1 // pred_region
      %s75 = ssub.s32 2048, 2048
      %76 = vsyncadd [#allocation9], %s75
      %s77 = sshll.u32 [#allocation10], 4
      %s78 = int_to_ptr.vmem [resolvable:$true] %s77
      %83 = dma.hbm_to_vmem [thread:$0]  %s7, 2048, %s78, [#allocation9], 128, 128, 8
    $region33: #{tpu_custom_call.1} parent=1 // pred_fallthru
      _
    // Predicated region
    $region34: #{tpu_custom_call.1} parent=1 // pred_check
      _
    $region35: #{tpu_custom_call.1} parent=1 // pred_check_branch
      %85 = sbr.rel (0) target = $region37
    $region36: #{tpu_custom_call.1} parent=1 // pred_region
      _
    $region37: #{tpu_custom_call.1} parent=1 // pred_fallthru
      _
    // Predicated region
    $region38: #{tpu_custom_call.1} parent=1 // pred_check
      _
    $region39: #{tpu_custom_call.1} parent=1 // pred_check_branch
      %87 = sbr.rel (0) target = $region41
    $region40: #{tpu_custom_call.1} parent=1 // pred_region
      %88 = dma.done [#allocation3], 256
    $region41: #{tpu_custom_call.1} parent=1 // pred_fallthru
      _
    // Predicated region
    $region42: #{tpu_custom_call.1} parent=1 // pred_check
      _
    $region43: #{tpu_custom_call.1} parent=1 // pred_check_branch
      %90 = sbr.rel (0) target = $region45
    $region44: #{tpu_custom_call.1} parent=1 // pred_region
      %91 = dma.done [#allocation6], 512
    $region45: #{tpu_custom_call.1} parent=1 // pred_fallthru
      _
    // Predicated region
    $region46: #{tpu_custom_call.1} parent=1 // pred_check
      _
    $region47: #{tpu_custom_call.1} parent=1 // pred_check_branch
      %93 = sbr.rel (0) target = $region49
    $region48: #{tpu_custom_call.1} parent=1 // pred_region
      %94 = dma.done [#allocation6], 2048
    $region49: #{tpu_custom_call.1} parent=1 // pred_fallthru
      _
    // Predicated region
    $region50: #{tpu_custom_call.1} parent=1 // pred_check
      _
    $region51: #{tpu_custom_call.1} parent=1 // pred_check_branch
      %96 = sbr.rel (0) target = $region53
    $region52: #{tpu_custom_call.1} parent=1 // pred_region
      %97 = dma.done [#allocation9], 2048
    $region53: #{tpu_custom_call.1} parent=1 // pred_fallthru
      _
    // Predicated region
    $region54: #{tpu_custom_call.1} parent=1 // pred_check
      _
    $region55: #{tpu_custom_call.1} parent=1 // pred_check_branch
      %99 = sbr.rel (0) target = $region57
    $region56: #{tpu_custom_call.1} parent=1 // pred_region
      %100 = dma.done [#allocation9], 2048
    $region57: #{tpu_custom_call.1} parent=1 // pred_fallthru
      _
    %v101 = vld [vmem:[#allocation2] sm:$0xff]
    %v102 = vld [vmem:[#allocation2 + $0x8] sm:$0xff]
    %v103 = vld [vmem:[#allocation5] sm:$0xff]
    %v104 = vld [vmem:[#allocation5 + $0x8] sm:$0xff]
    %v105 = vld [vmem:[#allocation5 + $0x10] sm:$0xff]
    %v106 = vld [vmem:[#allocation5 + $0x18] sm:$0xff]
    %v107 = vld [vmem:[%s2] sm:$0x1]
    %v109 = vlaneseq
    %v110 = vshrl.u32 %v109, 7
    %v111 = vsub.s32 0, %v110
    %v112 = vrot.slane %v107, %v111
    %vm114 = vcmask 261120
    %v116 = vsel %vm114, %v101, 0
    %v119 = vsel %vm114, %v102, 0
    %121 = vmatprep.subr.mxu0 0.0
    %122 = vmatpush1.msra.mxu0 %v103
    %123 = vmatprep.subr.mxu0 0.0
    %124 = vmatpush1.msra.mxu0 %v104
    %125 = vmatprep.subr.mxu0 0.0
    %126 = vmatpush1.msra.mxu0 %v105
    %127 = vmatprep.subr.mxu0 0.0
    %128 = vmatpush1.msra.mxu0 %v106
    %129 = vmatprep.subr.mxu0 0.0
    %130 = vmatpush1.msra.mxu0 0.0
    %131 = vmatprep.subr.mxu0 0.0
    %132 = vmatpush1.msra.mxu0 0.0
    %133 = vmatprep.subr.mxu0 0.0
    %134 = vmatpush1.msra.mxu0 0.0
    %135 = vmatprep.subr.mxu0 0.0
    %136 = vmatpush1.msra.mxu0 0.0
    %137 = vmatprep.subr.mxu0 0.0
    %138 = vmatpush1.msra.mxu0 0.0
    %139 = vmatprep.subr.mxu0 0.0
    %140 = vmatpush1.msra.mxu0 0.0
    %141 = vmatprep.subr.mxu0 0.0
    %142 = vmatpush1.msra.mxu0 0.0
    %143 = vmatprep.subr.mxu0 0.0
    %144 = vmatpush1.msra.mxu0 0.0
    %145 = vmatprep.subr.mxu0 0.0
    %146 = vmatpush1.msra.mxu0 0.0
    %147 = vmatprep.subr.mxu0 0.0
    %148 = vmatpush1.msra.mxu0 0.0
    %149 = vmatprep.subr.mxu0 0.0
    %150 = vmatpush1.msra.mxu0 0.0
    %151 = vmatprep.subr.mxu0 0.0
    %152 = vmatpush1.msra.mxu0 0.0
    %153 = vmatprep.subr.mxu0 0.0
    %154 = vmatpush1.msra.mxu0 0.0
    %155 = vmatprep.subr.mxu0 0.0
    %156 = vmatpush1.msra.mxu0 0.0
    %157 = vmatprep.subr.mxu0 0.0
    %158 = vmatpush1.msra.mxu0 0.0
    %159 = vmatprep.subr.mxu0 0.0
    %160 = vmatpush1.msra.mxu0 0.0
    %161 = vmatprep.subr.mxu0 0.0
    %162 = vmatpush1.msra.mxu0 0.0
    %163 = vmatprep.subr.mxu0 0.0
    %164 = vmatpush1.msra.mxu0 0.0
    %165 = vmatprep.subr.mxu0 0.0
    %166 = vmatpush1.msra.mxu0 0.0
    %167 = vmatprep.subr.mxu0 0.0
    %168 = vmatpush1.msra.mxu0 0.0
    %169 = vmatprep.subr.mxu0 0.0
    %170 = vmatpush1.msra.mxu0 0.0
    %171 = vmatprep.subr.mxu0 0.0
    %172 = vmatpush1.msra.mxu0 0.0
    %173 = vmatprep.subr.mxu0 0.0
    %174 = vmatpush1.msra.mxu0 0.0
    %175 = vmatprep.subr.mxu0 0.0
    %176 = vmatpush1.msra.mxu0 0.0
    %177 = vmatprep.subr.mxu0 0.0
    %178 = vmatpush1.msra.mxu0 0.0
    %179 = vmatprep.subr.mxu0 0.0
    %180 = vmatpush1.msra.mxu0 0.0
    %181 = vmatprep.subr.mxu0 0.0
    %182 = vmatpush1.msra.mxu0 0.0
    %183 = vmatprep.subr.mxu0 0.0
    %184 = vmatpush1.msra.mxu0 0.0
    %185 = vmatprep.mubr.f32.mxu0 0.0
    %186 = vmatmul.mubr.f32.gmra.mrb[0].mxu0 %v116
    %v187 = vpop.f32.mrb[0].mxu0
    %v188 = vadd.f32 %v112, %v187
    %v189 = vpop.f32.mrb[0].mxu0
    %190 = vmatprep.mubr.f32.mxu0 0.0
    %191 = vmatmul.mubr.f32.gmra.mrb[0].mxu0 %v119
    %v192 = vpop.f32.mrb[0].mxu0
    %v193 = vadd.f32 %v112, %v192
    %v194 = vpop.f32.mrb[0].mxu0
    %195 = vdwg.mxu0
    %v196 = vmax.f32 %v188, 0.0
    %v197 = vmax.f32 %v193, 0.0
    %v198 = vld [vmem:[#allocation7] sm:$0xff]
    %v199 = vld [vmem:[#allocation7 + $0x8] sm:$0xff]
    %v200 = vld [vmem:[#allocation7 + $0x10] sm:$0xff]
    %v201 = vld [vmem:[#allocation7 + $0x18] sm:$0xff]
    %v202 = vld [vmem:[#allocation7 + $0x20] sm:$0xff]
    %v203 = vld [vmem:[#allocation7 + $0x28] sm:$0xff]
    %v204 = vld [vmem:[#allocation7 + $0x30] sm:$0xff]
    %v205 = vld [vmem:[#allocation7 + $0x38] sm:$0xff]
    %v206 = vld [vmem:[#allocation7 + $0x40] sm:$0xff]
    %v207 = vld [vmem:[#allocation7 + $0x48] sm:$0xff]
    %v208 = vld [vmem:[#allocation7 + $0x50] sm:$0xff]
    %v209 = vld [vmem:[#allocation7 + $0x58] sm:$0xff]
    %v210 = vld [vmem:[#allocation7 + $0x60] sm:$0xff]
    %v211 = vld [vmem:[#allocation7 + $0x68] sm:$0xff]
    %v212 = vld [vmem:[#allocation7 + $0x70] sm:$0xff]
    %v213 = vld [vmem:[#allocation7 + $0x78] sm:$0xff]
    %v214 = vld [vmem:[%s4] sm:$0x1]
    %v216 = vlaneseq
    %v217 = vshrl.u32 %v216, 7
    %v218 = vsub.s32 0, %v217
    %v219 = vrot.slane %v214, %v218
    %221 = vmatprep.subr.mxu0 0.0
    %222 = vmatpush1.msra.mxu0 %v198
    %223 = vmatprep.subr.mxu0 0.0
    %224 = vmatpush1.msra.mxu0 %v199
    %225 = vmatprep.subr.mxu0 0.0
    %226 = vmatpush1.msra.mxu0 %v200
    %227 = vmatprep.subr.mxu0 0.0
    %228 = vmatpush1.msra.mxu0 %v201
    %229 = vmatprep.subr.mxu0 0.0
    %230 = vmatpush1.msra.mxu0 %v202
    %231 = vmatprep.subr.mxu0 0.0
    %232 = vmatpush1.msra.mxu0 %v203
    %233 = vmatprep.subr.mxu0 0.0
    %234 = vmatpush1.msra.mxu0 %v204
    %235 = vmatprep.subr.mxu0 0.0
    %236 = vmatpush1.msra.mxu0 %v205
    %237 = vmatprep.subr.mxu0 0.0
    %238 = vmatpush1.msra.mxu0 %v206
    %239 = vmatprep.subr.mxu0 0.0
    %240 = vmatpush1.msra.mxu0 %v207
    %241 = vmatprep.subr.mxu0 0.0
    %242 = vmatpush1.msra.mxu0 %v208
    %243 = vmatprep.subr.mxu0 0.0
    %244 = vmatpush1.msra.mxu0 %v209
    %245 = vmatprep.subr.mxu0 0.0
    %246 = vmatpush1.msra.mxu0 %v210
    %247 = vmatprep.subr.mxu0 0.0
    %248 = vmatpush1.msra.mxu0 %v211
    %249 = vmatprep.subr.mxu0 0.0
    %250 = vmatpush1.msra.mxu0 %v212
    %251 = vmatprep.subr.mxu0 0.0
    %252 = vmatpush1.msra.mxu0 %v213
    %253 = vmatprep.subr.mxu0 0.0
    %254 = vmatpush1.msra.mxu0 0.0
    %255 = vmatprep.subr.mxu0 0.0
    %256 = vmatpush1.msra.mxu0 0.0
    %257 = vmatprep.subr.mxu0 0.0
    %258 = vmatpush1.msra.mxu0 0.0
    %259 = vmatprep.subr.mxu0 0.0
    %260 = vmatpush1.msra.mxu0 0.0
    %261 = vmatprep.subr.mxu0 0.0
    %262 = vmatpush1.msra.mxu0 0.0
    %263 = vmatprep.subr.mxu0 0.0
    %264 = vmatpush1.msra.mxu0 0.0
    %265 = vmatprep.subr.mxu0 0.0
    %266 = vmatpush1.msra.mxu0 0.0
    %267 = vmatprep.subr.mxu0 0.0
    %268 = vmatpush1.msra.mxu0 0.0
    %269 = vmatprep.subr.mxu0 0.0
    %270 = vmatpush1.msra.mxu0 0.0
    %271 = vmatprep.subr.mxu0 0.0
    %272 = vmatpush1.msra.mxu0 0.0
    %273 = vmatprep.subr.mxu0 0.0
    %274 = vmatpush1.msra.mxu0 0.0
    %275 = vmatprep.subr.mxu0 0.0
    %276 = vmatpush1.msra.mxu0 0.0
    %277 = vmatprep.subr.mxu0 0.0
    %278 = vmatpush1.msra.mxu0 0.0
    %279 = vmatprep.subr.mxu0 0.0
    %280 = vmatpush1.msra.mxu0 0.0
    %281 = vmatprep.subr.mxu0 0.0
    %282 = vmatpush1.msra.mxu0 0.0
    %283 = vmatprep.subr.mxu0 0.0
    %284 = vmatpush1.msra.mxu0 0.0
    %285 = vmatprep.mubr.f32.mxu0 0.0
    %286 = vmatmul.mubr.f32.gmra.mrb[0].mxu0 %v196
    %v287 = vpop.f32.mrb[0].mxu0
    %v288 = vadd.f32 %v219, %v287
    %v289 = vpop.f32.mrb[0].mxu0
    %290 = vmatprep.mubr.f32.mxu0 0.0
    %291 = vmatmul.mubr.f32.gmra.mrb[0].mxu0 %v197
    %v292 = vpop.f32.mrb[0].mxu0
    %v293 = vadd.f32 %v219, %v292
    %v294 = vpop.f32.mrb[0].mxu0
    %295 = vdwg.mxu0
    %v296 = vmax.f32 %v288, 0.0
    %v297 = vmax.f32 %v293, 0.0
    %v298 = vld [vmem:[#allocation8] sm:$0xff]
    %v299 = vld [vmem:[#allocation8 + $0x8] sm:$0xff]
    %v300 = vld [vmem:[#allocation8 + $0x10] sm:$0xff]
    %v301 = vld [vmem:[#allocation8 + $0x18] sm:$0xff]
    %v302 = vld [vmem:[#allocation8 + $0x20] sm:$0xff]
    %v303 = vld [vmem:[#allocation8 + $0x28] sm:$0xff]
    %v304 = vld [vmem:[#allocation8 + $0x30] sm:$0xff]
    %v305 = vld [vmem:[#allocation8 + $0x38] sm:$0xff]
    %v306 = vld [vmem:[#allocation8 + $0x40] sm:$0xff]
    %v307 = vld [vmem:[#allocation8 + $0x48] sm:$0xff]
    %v308 = vld [vmem:[#allocation8 + $0x50] sm:$0xff]
    %v309 = vld [vmem:[#allocation8 + $0x58] sm:$0xff]
    %v310 = vld [vmem:[#allocation8 + $0x60] sm:$0xff]
    %v311 = vld [vmem:[#allocation8 + $0x68] sm:$0xff]
    %v312 = vld [vmem:[#allocation8 + $0x70] sm:$0xff]
    %v313 = vld [vmem:[#allocation8 + $0x78] sm:$0xff]
    %v314 = vld [vmem:[%s6] sm:$0x1]
    %v316 = vlaneseq
    %v317 = vshrl.u32 %v316, 7
    %v318 = vsub.s32 0, %v317
    %v319 = vrot.slane %v314, %v318
    %321 = vmatprep.subr.mxu0 0.0
    %322 = vmatpush1.msra.mxu0 %v298
    %323 = vmatprep.subr.mxu0 0.0
    %324 = vmatpush1.msra.mxu0 %v299
    %325 = vmatprep.subr.mxu0 0.0
    %326 = vmatpush1.msra.mxu0 %v300
    %327 = vmatprep.subr.mxu0 0.0
    %328 = vmatpush1.msra.mxu0 %v301
    %329 = vmatprep.subr.mxu0 0.0
    %330 = vmatpush1.msra.mxu0 %v302
    %331 = vmatprep.subr.mxu0 0.0
    %332 = vmatpush1.msra.mxu0 %v303
    %333 = vmatprep.subr.mxu0 0.0
    %334 = vmatpush1.msra.mxu0 %v304
    %335 = vmatprep.subr.mxu0 0.0
    %336 = vmatpush1.msra.mxu0 %v305
    %337 = vmatprep.subr.mxu0 0.0
    %338 = vmatpush1.msra.mxu0 %v306
    %339 = vmatprep.subr.mxu0 0.0
    %340 = vmatpush1.msra.mxu0 %v307
    %341 = vmatprep.subr.mxu0 0.0
    %342 = vmatpush1.msra.mxu0 %v308
    %343 = vmatprep.subr.mxu0 0.0
    %344 = vmatpush1.msra.mxu0 %v309
    %345 = vmatprep.subr.mxu0 0.0
    %346 = vmatpush1.msra.mxu0 %v310
    %347 = vmatprep.subr.mxu0 0.0
    %348 = vmatpush1.msra.mxu0 %v311
    %349 = vmatprep.subr.mxu0 0.0
    %350 = vmatpush1.msra.mxu0 %v312
    %351 = vmatprep.subr.mxu0 0.0
    %352 = vmatpush1.msra.mxu0 %v313
    %353 = vmatprep.subr.mxu0 0.0
    %354 = vmatpush1.msra.mxu0 0.0
    %355 = vmatprep.subr.mxu0 0.0
    %356 = vmatpush1.msra.mxu0 0.0
    %357 = vmatprep.subr.mxu0 0.0
    %358 = vmatpush1.msra.mxu0 0.0
    %359 = vmatprep.subr.mxu0 0.0
    %360 = vmatpush1.msra.mxu0 0.0
    %361 = vmatprep.subr.mxu0 0.0
    %362 = vmatpush1.msra.mxu0 0.0
    %363 = vmatprep.subr.mxu0 0.0
    %364 = vmatpush1.msra.mxu0 0.0
    %365 = vmatprep.subr.mxu0 0.0
    %366 = vmatpush1.msra.mxu0 0.0
    %367 = vmatprep.subr.mxu0 0.0
    %368 = vmatpush1.msra.mxu0 0.0
    %369 = vmatprep.subr.mxu0 0.0
    %370 = vmatpush1.msra.mxu0 0.0
    %371 = vmatprep.subr.mxu0 0.0
    %372 = vmatpush1.msra.mxu0 0.0
    %373 = vmatprep.subr.mxu0 0.0
    %374 = vmatpush1.msra.mxu0 0.0
    %375 = vmatprep.subr.mxu0 0.0
    %376 = vmatpush1.msra.mxu0 0.0
    %377 = vmatprep.subr.mxu0 0.0
    %378 = vmatpush1.msra.mxu0 0.0
    %379 = vmatprep.subr.mxu0 0.0
    %380 = vmatpush1.msra.mxu0 0.0
    %381 = vmatprep.subr.mxu0 0.0
    %382 = vmatpush1.msra.mxu0 0.0
    %383 = vmatprep.subr.mxu0 0.0
    %384 = vmatpush1.msra.mxu0 0.0
    %385 = vmatprep.mubr.f32.mxu0 0.0
    %386 = vmatmul.mubr.f32.gmra.mrb[0].mxu0 %v296
    %v387 = vpop.f32.mrb[0].mxu0
    %v388 = vadd.f32 %v319, %v387
    %v389 = vpop.f32.mrb[0].mxu0
    %390 = vmatprep.mubr.f32.mxu0 0.0
    %391 = vmatmul.mubr.f32.gmra.mrb[0].mxu0 %v297
    %v392 = vpop.f32.mrb[0].mxu0
    %v393 = vadd.f32 %v319, %v392
    %v394 = vpop.f32.mrb[0].mxu0
    %395 = vdwg.mxu0
    %v396 = vmax.f32 %v388, 0.0
    %v397 = vmax.f32 %v393, 0.0
    %v398 = vld [vmem:[#allocation10] sm:$0xff]
    %v399 = vld [vmem:[#allocation10 + $0x8] sm:$0xff]
    %v400 = vld [vmem:[#allocation10 + $0x10] sm:$0xff]
    %v401 = vld [vmem:[#allocation10 + $0x18] sm:$0xff]
    %v402 = vld [vmem:[#allocation10 + $0x20] sm:$0xff]
    %v403 = vld [vmem:[#allocation10 + $0x28] sm:$0xff]
    %v404 = vld [vmem:[#allocation10 + $0x30] sm:$0xff]
    %v405 = vld [vmem:[#allocation10 + $0x38] sm:$0xff]
    %v406 = vld [vmem:[#allocation10 + $0x40] sm:$0xff]
    %v407 = vld [vmem:[#allocation10 + $0x48] sm:$0xff]
    %v408 = vld [vmem:[#allocation10 + $0x50] sm:$0xff]
    %v409 = vld [vmem:[#allocation10 + $0x58] sm:$0xff]
    %v410 = vld [vmem:[#allocation10 + $0x60] sm:$0xff]
    %v411 = vld [vmem:[#allocation10 + $0x68] sm:$0xff]
    %v412 = vld [vmem:[#allocation10 + $0x70] sm:$0xff]
    %v413 = vld [vmem:[#allocation10 + $0x78] sm:$0xff]
    %v414 = vld [vmem:[%s8] sm:$0x1]
    %v416 = vlaneseq
    %v417 = vshrl.u32 %v416, 7
    %v418 = vsub.s32 0, %v417
    %v419 = vrot.slane %v414, %v418
    %421 = vmatprep.subr.mxu0 0.0
    %422 = vmatpush1.msra.mxu0 %v398
    %423 = vmatprep.subr.mxu0 0.0
    %424 = vmatpush1.msra.mxu0 %v399
    %425 = vmatprep.subr.mxu0 0.0
    %426 = vmatpush1.msra.mxu0 %v400
    %427 = vmatprep.subr.mxu0 0.0
    %428 = vmatpush1.msra.mxu0 %v401
    %429 = vmatprep.subr.mxu0 0.0
    %430 = vmatpush1.msra.mxu0 %v402
    %431 = vmatprep.subr.mxu0 0.0
    %432 = vmatpush1.msra.mxu0 %v403
    %433 = vmatprep.subr.mxu0 0.0
    %434 = vmatpush1.msra.mxu0 %v404
    %435 = vmatprep.subr.mxu0 0.0
    %436 = vmatpush1.msra.mxu0 %v405
    %437 = vmatprep.subr.mxu0 0.0
    %438 = vmatpush1.msra.mxu0 %v406
    %439 = vmatprep.subr.mxu0 0.0
    %440 = vmatpush1.msra.mxu0 %v407
    %441 = vmatprep.subr.mxu0 0.0
    %442 = vmatpush1.msra.mxu0 %v408
    %443 = vmatprep.subr.mxu0 0.0
    %444 = vmatpush1.msra.mxu0 %v409
    %445 = vmatprep.subr.mxu0 0.0
    %446 = vmatpush1.msra.mxu0 %v410
    %447 = vmatprep.subr.mxu0 0.0
    %448 = vmatpush1.msra.mxu0 %v411
    %449 = vmatprep.subr.mxu0 0.0
    %450 = vmatpush1.msra.mxu0 %v412
    %451 = vmatprep.subr.mxu0 0.0
    %452 = vmatpush1.msra.mxu0 %v413
    %453 = vmatprep.subr.mxu0 0.0
    %454 = vmatpush1.msra.mxu0 0.0
    %455 = vmatprep.subr.mxu0 0.0
    %456 = vmatpush1.msra.mxu0 0.0
    %457 = vmatprep.subr.mxu0 0.0
    %458 = vmatpush1.msra.mxu0 0.0
    %459 = vmatprep.subr.mxu0 0.0
    %460 = vmatpush1.msra.mxu0 0.0
    %461 = vmatprep.subr.mxu0 0.0
    %462 = vmatpush1.msra.mxu0 0.0
    %463 = vmatprep.subr.mxu0 0.0
    %464 = vmatpush1.msra.mxu0 0.0
    %465 = vmatprep.subr.mxu0 0.0
    %466 = vmatpush1.msra.mxu0 0.0
    %467 = vmatprep.subr.mxu0 0.0
    %468 = vmatpush1.msra.mxu0 0.0
    %469 = vmatprep.subr.mxu0 0.0
    %470 = vmatpush1.msra.mxu0 0.0
    %471 = vmatprep.subr.mxu0 0.0
    %472 = vmatpush1.msra.mxu0 0.0
    %473 = vmatprep.subr.mxu0 0.0
    %474 = vmatpush1.msra.mxu0 0.0
    %475 = vmatprep.subr.mxu0 0.0
    %476 = vmatpush1.msra.mxu0 0.0
    %477 = vmatprep.subr.mxu0 0.0
    %478 = vmatpush1.msra.mxu0 0.0
    %479 = vmatprep.subr.mxu0 0.0
    %480 = vmatpush1.msra.mxu0 0.0
    %481 = vmatprep.subr.mxu0 0.0
    %482 = vmatpush1.msra.mxu0 0.0
    %483 = vmatprep.subr.mxu0 0.0
    %484 = vmatpush1.msra.mxu0 0.0
    %485 = vmatprep.mubr.f32.mxu0 0.0
    %486 = vmatmul.mubr.f32.gmra.mrb[0].mxu0 %v396
    %v487 = vpop.f32.mrb[0].mxu0
    %v488 = vadd.f32 %v419, %v487
    %v489 = vpop.f32.mrb[0].mxu0
    %490 = vmatprep.mubr.f32.mxu0 0.0
    %491 = vmatmul.mubr.f32.gmra.mrb[0].mxu0 %v397
    %v492 = vpop.f32.mrb[0].mxu0
    %v493 = vadd.f32 %v419, %v492
    %v494 = vpop.f32.mrb[0].mxu0
    %495 = vdwg.mxu0
    %496 = vst [vmem:[#allocation11] sm:$0xff] %v488
    %497 = vst [vmem:[#allocation11 + $0x8] sm:$0xff] %v493
    // Predicated region
    $region58: #{tpu_custom_call.1} parent=1 // pred_check
      _
    $region59: #{tpu_custom_call.1} parent=1 // pred_check_branch
      %499 = sbr.rel (0) target = $region61
    $region60: #{tpu_custom_call.1} parent=1 // pred_region
      %s501 = ssub.s32 256, 256
      %502 = vsyncadd [#allocation4], %s501
      %s503 = sshll.u32 [#allocation11], 4
      %s504 = int_to_ptr.vmem [resolvable:$true] %s503
      %509 = dma.vmem_to_hbm [thread:$0]  %s504, 256, %s9, [#allocation4], 128, 128, 8
    $region61: #{tpu_custom_call.1} parent=1 // pred_fallthru
      _
    // Predicated region
    $region62: #{tpu_custom_call.1} parent=1 // pred_check
      _
    $region63: #{tpu_custom_call.1} parent=1 // pred_check_branch
      %511 = sbr.rel (0) target = $region65
    $region64: #{tpu_custom_call.1} parent=1 // pred_region
      %512 = dma.done [#allocation4], 256
    $region65: #{tpu_custom_call.1} parent=1 // pred_fallthru
      _
    %513 = vsyncpa [#allocation3], 1
    %514 = vsyncpa [#allocation6], 1
    %515 = vsyncpa [#allocation9], 1
    %516 = vsyncpa [#allocation4], 1

</llo_original>
